<compile_context>
chip_gen: v6e
topology: v6e:2x2x1
jax: 0.10.0
libtpu: 0.0.40
codegen_flags: <defaults>
</compile_context>

<pallas_src>
import functools

import jax
import jax.numpy as jnp
from jax.experimental import pallas as pl
from jax.experimental.pallas import tpu as pltpu


def _round_up(x: int, m: int) -> int:
    return ((x + m - 1) // m) * m


def _matmul_bias_kernel(x_ref, w_ref, b_ref, o_ref, acc_ref):
    # x_ref: (tm, tk), w_ref: (tk, tn), b_ref: (1, tn), o_ref: (tm, tn)
    # acc_ref: (tm, tn) f32 scratch, persistent across the K (last, "arbitrary") axis.
    @pl.when(pl.program_id(2) == 0)
    def _init():
        acc_ref[...] = jnp.zeros_like(acc_ref)

    acc_ref[...] += jnp.dot(
        x_ref[...], w_ref[...], preferred_element_type=jnp.float32
    )

    @pl.when(pl.program_id(2) == pl.num_programs(2) - 1)
    def _finalize():
        o_ref[...] = (acc_ref[...] + b_ref[...].astype(jnp.float32)).astype(o_ref.dtype)


@functools.partial(
    jax.jit,
    static_argnames=("in_features", "out_features", "cluster_dim", "compute_dtype"),
)
def clustered_linear(
    x,
    cluster,
    index,
    bias,
    *,
    in_features,
    out_features,
    cluster_dim,
    compute_dtype=jnp.bfloat16,
):
    """Forward pass of CustomLinear.

    cluster : (num_clusters, cluster_dim) float codebook
    index   : (in_features * (out_features + deficiency) // cluster_dim,) int32
    bias    : (out_features,) or None
    compute_dtype : dtype fed to the MXU (bf16 default; f32 accumulation always).
    """
    deficiency = (-out_features) % cluster_dim
    n_tot = out_features + deficiency  # reconstructed weight width (deficiency kept)

    # Tile targets (multiples of 8 / 128; shrunk to the padded dims for small shapes).
    TM, TN, TK = 256, 256, 512

    lead = x.shape[:-1]
    x2 = x.reshape(-1, in_features)
    M = x2.shape[0]

    tm = min(TM, _round_up(M, 8))
    tn = min(TN, _round_up(n_tot, 128))
    tk = min(TK, _round_up(in_features, 128))

    Mp = _round_up(M, tm)
    Np = _round_up(n_tot, tn)   # lane-dense output width
    Kp = _round_up(in_features, tk)

    # --- weight reconstruction (dequant glue, plain JAX) -----------------------
    # Keep the deficiency columns (garbage-but-finite); zero-pad to (Kp, Np).
    vectors = jnp.take(cluster, index, axis=0)                 # (idx_len, cluster_dim)
    weight = vectors.reshape(in_features, n_tot)
    weight = jnp.pad(weight, ((0, Kp - in_features), (0, Np - n_tot)))
    weight = weight.astype(compute_dtype)

    # --- pad activations -------------------------------------------------------
    xp = x2
    if (Mp != M) or (Kp != in_features):
        xp = jnp.pad(x2, ((0, Mp - M), (0, Kp - in_features)))
    xp = xp.astype(compute_dtype)

    if bias is None:
        bias_arr = jnp.zeros((out_features,), dtype=jnp.float32)
    else:
        bias_arr = bias.astype(jnp.float32)
    bias2 = jnp.pad(bias_arr, (0, Np - out_features)).reshape(1, Np)

    # --- Pallas tiled matmul + bias -------------------------------------------
    grid = (Mp // tm, Np // tn, Kp // tk)
    out = pl.pallas_call(
        _matmul_bias_kernel,
        out_shape=jax.ShapeDtypeStruct((Mp, Np), x.dtype),
        grid=grid,
        in_specs=[
            pl.BlockSpec((tm, tk), lambda i, j, k: (i, k)),   # x tile
            pl.BlockSpec((tk, tn), lambda i, j, k: (k, j)),   # weight tile
            pl.BlockSpec((1, tn), lambda i, j, k: (0, j)),    # bias tile
        ],
        out_specs=pl.BlockSpec((tm, tn), lambda i, j, k: (i, j)),
        scratch_shapes=[pltpu.VMEM((tm, tn), jnp.float32)],
        compiler_params=pltpu.CompilerParams(
            dimension_semantics=("parallel", "parallel", "arbitrary"),
            vmem_limit_bytes=48 * 1024 * 1024,  # headroom below 128/128/64 MiB physical
        ),
    )(xp, weight, bias2)

    return out[:M, :out_features].reshape(*lead, out_features)


if __name__ == "__main__":
    # Small, deterministic example consistent with the module's __init__.
    batch, seq = 2, 8
    in_features = 32
    out_features = 30       # not a multiple of cluster_dim -> deficiency path exercised
    num_clusters = 16
    cluster_dim = 4
    deficiency = (-out_features) % cluster_dim            # = 2
    index_length = in_features * (out_features + deficiency) // cluster_dim

    key = jax.random.PRNGKey(0)
    k_x, k_c, k_i, k_b = jax.random.split(key, 4)

    x = jax.random.normal(k_x, (batch, seq, in_features), dtype=jnp.float32)
    cluster = jax.random.normal(k_c, (num_clusters, cluster_dim), dtype=jnp.float32)
    index = jax.random.randint(k_i, (index_length,), 0, num_clusters, dtype=jnp.int32)
    bias = jax.random.normal(k_b, (out_features,), dtype=jnp.float32)

    # Pure-JAX reference.
    w_ref = jnp.take(cluster, index, axis=0).reshape(in_features, -1)[:, :out_features]
    ref = x @ w_ref + bias

    # bf16-MXU path (default; v6e/v7x fast path) — loose tolerance vs f32 reference.
    out_bf16 = clustered_linear(
        x, cluster, index, bias,
        in_features=in_features, out_features=out_features, cluster_dim=cluster_dim,
        compute_dtype=jnp.bfloat16,
    )
    out_bf16 = jax.block_until_ready(out_bf16)
    assert out_bf16.shape == (batch, seq, out_features)
    assert jnp.allclose(out_bf16, ref, atol=1e-1, rtol=1e-1)

    # f32 path (v5e-friendly) — tight tolerance.
    out_f32 = clustered_linear(
        x, cluster, index, bias,
        in_features=in_features, out_features=out_features, cluster_dim=cluster_dim,
        compute_dtype=jnp.float32,
    )
    out_f32 = jax.block_until_ready(out_f32)
    assert out_f32.shape == (batch, seq, out_features)
    assert jnp.allclose(out_f32, ref, atol=1e-4, rtol=1e-4)

    print("KERNEL_OK")
</pallas_src>

<mosaic_0001>
module attributes {stable_mosaic.version = 11 : i64} {
  func.func @_matmul_bias_kernel(%arg0: i32, %arg1: i32, %arg2: i32, %arg3: memref<16x128xbf16, #tpu.memory_space<vmem>>, %arg4: memref<128x128xbf16, #tpu.memory_space<vmem>>, %arg5: memref<1x128xf32, #tpu.memory_space<vmem>>, %arg6: memref<16x128xf32, #tpu.memory_space<vmem>>, %arg7: memref<16x128xf32, #tpu.memory_space<vmem>>) attributes {dimension_semantics = [#tpu.dimension_semantics<parallel>, #tpu.dimension_semantics<parallel>, #tpu.dimension_semantics<arbitrary>], iteration_bounds = array<i64: 1, 1, 1>, scalar_prefetch = 0 : i64, scratch_operands = 1 : i64, tpu.core_type = #tpu.core_type<tc>, window_params = [{transform_indices = @transform_0, window_bounds = array<i64: 16, 128>}, {transform_indices = @transform_1, window_bounds = array<i64: 128, 128>}, {transform_indices = @transform_2, window_bounds = array<i64: 1, 128>}, {transform_indices = @transform_3, window_bounds = array<i64: 16, 128>}]} {
    %c0_i32 = arith.constant 0 : i32
    %0 = arith.cmpi eq, %arg2, %c0_i32 : i32
    %1 = arith.extui %0 : i1 to i32
    %c0_i32_0 = arith.constant 0 : i32
    %2 = arith.cmpi ne, %1, %c0_i32_0 : i32
    scf.if %2 {
      %cst_10 = arith.constant 0.000000e+00 : f32
      %12 = vector.broadcast %cst_10 : f32 to vector<16x128xf32>
      %c0_11 = arith.constant 0 : index
      %c0_12 = arith.constant 0 : index
      %13 = vector.load %arg7[%c0_11, %c0_12] : memref<16x128xf32, #tpu.memory_space<vmem>>, vector<16x128xf32>
      tpu.vector_store %arg7[%c0_11, %c0_12], %12 {strides = array<i32>} : memref<16x128xf32, #tpu.memory_space<vmem>>, vector<16x128xf32>,
    } else {
    }
    %c0 = arith.constant 0 : index
    %c0_1 = arith.constant 0 : index
    %3 = vector.load %arg7[%c0, %c0_1] : memref<16x128xf32, #tpu.memory_space<vmem>>, vector<16x128xf32>
    %c0_2 = arith.constant 0 : index
    %c0_3 = arith.constant 0 : index
    %4 = vector.load %arg3[%c0_2, %c0_3] : memref<16x128xbf16, #tpu.memory_space<vmem>>, vector<16x128xbf16>
    %c0_4 = arith.constant 0 : index
    %c0_5 = arith.constant 0 : index
    %5 = vector.load %arg4[%c0_4, %c0_5] : memref<128x128xbf16, #tpu.memory_space<vmem>>, vector<128x128xbf16>
    %cst = arith.constant dense<0.000000e+00> : vector<16x128xf32>
    %6 = tpu.matmul %4, %5, %cst {dimension_numbers = #tpu.dot_dimension_numbers<[1], [0], [0], [1], [0, 0, 1, 1], [], []>} : vector<16x128xbf16>, vector<128x128xbf16>, vector<16x128xf32> -> vector<16x128xf32>
    %7 = arith.addf %3, %6 : vector<16x128xf32>
    %c0_6 = arith.constant 0 : index
    %c0_7 = arith.constant 0 : index
    %8 = vector.load %arg7[%c0_6, %c0_7] : memref<16x128xf32, #tpu.memory_space<vmem>>, vector<16x128xf32>
    tpu.vector_store %arg7[%c0_6, %c0_7], %7 {strides = array<i32>} : memref<16x128xf32, #tpu.memory_space<vmem>>, vector<16x128xf32>,
    %c0_i32_8 = arith.constant 0 : i32
    %9 = arith.cmpi eq, %arg2, %c0_i32_8 : i32
    %10 = arith.extui %9 : i1 to i32
    %c0_i32_9 = arith.constant 0 : i32
    %11 = arith.cmpi ne, %10, %c0_i32_9 : i32
    scf.if %11 {
      %c0_10 = arith.constant 0 : index
      %c0_11 = arith.constant 0 : index
      %12 = vector.load %arg7[%c0_10, %c0_11] : memref<16x128xf32, #tpu.memory_space<vmem>>, vector<16x128xf32>
      %c0_12 = arith.constant 0 : index
      %c0_13 = arith.constant 0 : index
      %13 = vector.load %arg5[%c0_12, %c0_13] : memref<1x128xf32, #tpu.memory_space<vmem>>, vector<1x128xf32>
      %14 = vector.broadcast %13 : vector<1x128xf32> to vector<16x128xf32>
      %15 = arith.addf %12, %14 : vector<16x128xf32>
      %c0_14 = arith.constant 0 : index
      %c0_15 = arith.constant 0 : index
      %16 = vector.load %arg6[%c0_14, %c0_15] : memref<16x128xf32, #tpu.memory_space<vmem>>, vector<16x128xf32>
      tpu.vector_store %arg6[%c0_14, %c0_15], %15 {strides = array<i32>} : memref<16x128xf32, #tpu.memory_space<vmem>>, vector<16x128xf32>,
    } else {
    }
    return
  }
  func.func @transform_0(%arg0: i32, %arg1: i32, %arg2: i32) -> (i32, i32) {
    %c0_i32 = arith.constant 0 : i32
    return %arg0, %arg2 : i32, i32
  }
  func.func @transform_1(%arg0: i32, %arg1: i32, %arg2: i32) -> (i32, i32) {
    %c0_i32 = arith.constant 0 : i32
    return %arg2, %arg1 : i32, i32
  }
  func.func @transform_2(%arg0: i32, %arg1: i32, %arg2: i32) -> (i32, i32) {
    %c0_i32 = arith.constant 0 : i32
    %c0_i32_0 = arith.constant 0 : i32
    return %c0_i32, %arg1 : i32, i32
  }
  func.func @transform_3(%arg0: i32, %arg1: i32, %arg2: i32) -> (i32, i32) {
    %c0_i32 = arith.constant 0 : i32
    return %arg0, %arg1 : i32, i32
  }
}

</mosaic_0001>

<llo_original>
// kernel: clustered_linear.1
$region0: #{clustered_linear.1}
  #allocation0 [shape = 'u32[]', space=smem, size = 0x4, offset = 0x4, fixed_abs, tag = 'smem constant byte address 0x4 - core index']
  #allocation1 [shape = 'u32[144,128]{1,0:T(1,128)}', space=vmem, size = 0x12000, scoped, tag = 'internal scratch']
  #allocation2 [shape = 'f32[16,128]{1,0:T(8,128)}', space=vmem, size = 0x2000, scoped, tag = 'scratch operand']
  %s0 = inlined_call_operand.vmem [shape: bf16[16,128], index: 0, kind: input, shape index: {}]
  %s1 = inlined_call_operand.vmem [shape: bf16[128,128], index: 1, kind: input, shape index: {}]
  %s2 = inlined_call_operand.vmem [shape: f32[1,128], index: 2, kind: input, shape index: {}]
  %s3 = inlined_call_operand.vmem [shape: f32[16,128], index: 3, kind: output, shape index: {}]
  %s4 = sld [smem:[#allocation0]]
  $region30: #{clustered_linear.1} parent=0
    _
  %s6 = ssub.s32 1, %s4
  %s7 = scalar_select 0, %s6, %s4
  // Predicated region
  $region2: #{clustered_linear.1} parent=0 // pred_check
    _
  $region3: #{clustered_linear.1} parent=0 // pred_check_branch
    %9 = sbr.rel (0) target = $region5
  $region4: #{clustered_linear.1} parent=0 // pred_region
    _
  $region5: #{clustered_linear.1} parent=0 // pred_fallthru
    _
  // Predicated region
  $region6: #{clustered_linear.1} parent=0 // pred_check
    _
  $region7: #{clustered_linear.1} parent=0 // pred_check_branch
    %11 = sbr.rel (0) target = $region9
  $region8: #{clustered_linear.1} parent=0 // pred_region
    _
  $region9: #{clustered_linear.1} parent=0 // pred_fallthru
    _
  // Predicated region
  $region10: #{clustered_linear.1} parent=0 // pred_check
    _
  $region11: #{clustered_linear.1} parent=0 // pred_check_branch
    %13 = sbr.rel (0) target = $region13
  $region12: #{clustered_linear.1} parent=0 // pred_region
    _
  $region13: #{clustered_linear.1} parent=0 // pred_fallthru
    _
  %p15 = scmp.eq.s32.totalorder 0, 0
  // Predicated region
  $region14: #{clustered_linear.1} parent=0 // pred_check
    %p16 = pneg %p15
  $region15: #{clustered_linear.1} parent=0 // pred_check_branch
    %18 = sbr.rel (%p16) target = $region17
  $region16: #{clustered_linear.1} parent=0 // pred_region
    %19 = vst [vmem:[#allocation2] sm:$0xff] 0.0
    %20 = vst [vmem:[#allocation2 + $0x8] sm:$0xff] 0.0
  $region17: #{clustered_linear.1} parent=0 // pred_fallthru
    _
  %v21 = vld [vmem:[#allocation2] sm:$0xff]
  %v22 = vld [vmem:[#allocation2 + $0x8] sm:$0xff]
  %v23 = vld [vmem:[%s0] sm:$0xf]
  %v24 = vld [vmem:[%s0 + $0x4] sm:$0xf]
  %v25 = vld [vmem:[%s1] sm:$0xf]
  %v26 = vld [vmem:[%s1 + $0x4] sm:$0xf]
  %v27 = vld [vmem:[%s1 + $0x8] sm:$0xf]
  %v28 = vld [vmem:[%s1 + $0xc] sm:$0xf]
  %v29 = vld [vmem:[%s1 + $0x10] sm:$0xf]
  %v30 = vld [vmem:[%s1 + $0x14] sm:$0xf]
  %v31 = vld [vmem:[%s1 + $0x18] sm:$0xf]
  %v32 = vld [vmem:[%s1 + $0x1c] sm:$0xf]
  %v33 = vld [vmem:[%s1 + $0x20] sm:$0xf]
  %v34 = vld [vmem:[%s1 + $0x24] sm:$0xf]
  %v35 = vld [vmem:[%s1 + $0x28] sm:$0xf]
  %v36 = vld [vmem:[%s1 + $0x2c] sm:$0xf]
  %v37 = vld [vmem:[%s1 + $0x30] sm:$0xf]
  %v38 = vld [vmem:[%s1 + $0x34] sm:$0xf]
  %v39 = vld [vmem:[%s1 + $0x38] sm:$0xf]
  %v40 = vld [vmem:[%s1 + $0x3c] sm:$0xf]
  %v43 = vunpack.c.l.b16 %v23
  %v44 = vunpack.c.l.b16 %v24
  %v45 = vpack.c.b16 %v44, %v43
  %v63 = vunpack.c.l.b16 %v25
  %v64 = vunpack.c.l.b16 %v26
  %v65 = vunpack.c.l.b16 %v27
  %v66 = vunpack.c.l.b16 %v28
  %v67 = vunpack.c.l.b16 %v29
  %v68 = vunpack.c.l.b16 %v30
  %v69 = vunpack.c.l.b16 %v31
  %v70 = vunpack.c.l.b16 %v32
  %v71 = vunpack.c.l.b16 %v33
  %v72 = vunpack.c.l.b16 %v34
  %v73 = vunpack.c.l.b16 %v35
  %v74 = vunpack.c.l.b16 %v36
  %v75 = vunpack.c.l.b16 %v37
  %v76 = vunpack.c.l.b16 %v38
  %v77 = vunpack.c.l.b16 %v39
  %v78 = vunpack.c.l.b16 %v40
  %v79 = vpack.c.b16 %v64, %v63
  %v80 = vpack.c.b16 %v66, %v65
  %v81 = vpack.c.b16 %v68, %v67
  %v82 = vpack.c.b16 %v70, %v69
  %v83 = vpack.c.b16 %v72, %v71
  %v84 = vpack.c.b16 %v74, %v73
  %v85 = vpack.c.b16 %v76, %v75
  %v86 = vpack.c.b16 %v78, %v77
  %95 = vmatprep.subr.bf16.mxu0 0
  %96 = vmatpush1.bf16.msra.mxu0 %v86
  %97 = vmatprep.subr.bf16.mxu0 0
  %98 = vmatpush1.bf16.msra.mxu0 %v85
  %99 = vmatprep.subr.bf16.mxu0 0
  %100 = vmatpush1.bf16.msra.mxu0 %v84
  %101 = vmatprep.subr.bf16.mxu0 0
  %102 = vmatpush1.bf16.msra.mxu0 %v83
  %103 = vmatprep.subr.bf16.mxu0 0
  %104 = vmatpush1.bf16.msra.mxu0 %v82
  %105 = vmatprep.subr.bf16.mxu0 0
  %106 = vmatpush1.bf16.msra.mxu0 %v81
  %107 = vmatprep.subr.bf16.mxu0 0
  %108 = vmatpush1.bf16.msra.mxu0 %v80
  %109 = vmatprep.subr.bf16.mxu0 0
  %110 = vmatpush1.bf16.msra.mxu0 %v79
  %111 = vmatprep.subr.bf16.mxu0 0
  %112 = vmatpush2.bf16.msra.mxu0 0
  %113 = vmatprep.subr.bf16.mxu0 0
  %114 = vmatpush2.bf16.msra.mxu0 0
  %115 = vmatprep.subr.bf16.mxu0 0
  %116 = vmatpush2.bf16.msra.mxu0 0
  %117 = vmatprep.subr.bf16.mxu0 0
  %118 = vmatpush2.bf16.msra.mxu0 0
  %119 = vmatprep.subr.bf16.mxu0 0
  %120 = vmatpush2.bf16.msra.mxu0 0
  %121 = vmatprep.subr.bf16.mxu0 0
  %122 = vmatpush2.bf16.msra.mxu0 0
  %123 = vmatprep.subr.bf16.mxu0 0
  %124 = vmatpush2.bf16.msra.mxu0 0
  %125 = vmatprep.subr.bf16.mxu0 0
  %126 = vmatpush2.bf16.msra.mxu0 0
  %127 = vmatprep.mubr.bf16.mxu0 0
  %128 = vmatmul.mubr.bf16.gmra.mxu0 %v45
  %v129 = vpop.f32.mrf.mxu0
  %v130 = vadd.f32 0.0, %v129
  %v131 = vpop.f32.mrf.mxu0
  %v132 = vpop.f32.mrf.mxu0
  %v133 = vadd.f32 0.0, %v132
  %v134 = vpop.f32.mrf.mxu0
  %135 = vdwg.mxu0
  %v136 = vadd.f32 %v21, %v130
  %v137 = vadd.f32 %v22, %v133
  %138 = vst [vmem:[#allocation2] sm:$0xff] %v136
  %139 = vst [vmem:[#allocation2 + $0x8] sm:$0xff] %v137
  // Predicated region
  $region18: #{clustered_linear.1} parent=0 // pred_check
    %p140 = pneg %p15
  $region19: #{clustered_linear.1} parent=0 // pred_check_branch
    %142 = sbr.rel (%p140) target = $region21
  $region20: #{clustered_linear.1} parent=0 // pred_region
    %v143 = vld [vmem:[#allocation2] sm:$0xff]
    %v144 = vld [vmem:[#allocation2 + $0x8] sm:$0xff]
    %v145 = vld [vmem:[%s2] sm:$0x1]
    %v147 = vlaneseq
    %v148 = vshrl.u32 %v147, 7
    %v149 = vsub.s32 0, %v148
    %v150 = vrot.slane %v145, %v149
    %v152 = vadd.f32 %v143, %v150
    %v153 = vadd.f32 %v144, %v150
    %154 = vst [vmem:[%s3] sm:$0xff] %v152
    %155 = vst [vmem:[%s3 + $0x8] sm:$0xff] %v153
  $region21: #{clustered_linear.1} parent=0 // pred_fallthru
    _
  // Predicated region
  $region22: #{clustered_linear.1} parent=0 // pred_check
    _
  $region23: #{clustered_linear.1} parent=0 // pred_check_branch
    %157 = sbr.rel (0) target = $region25
  $region24: #{clustered_linear.1} parent=0 // pred_region
    _
  $region25: #{clustered_linear.1} parent=0 // pred_fallthru
    _
  // Predicated region
  $region26: #{clustered_linear.1} parent=0 // pred_check
    _
  $region27: #{clustered_linear.1} parent=0 // pred_check_branch
    %159 = sbr.rel (0) target = $region29
  $region28: #{clustered_linear.1} parent=0 // pred_region
    _
  $region29: #{clustered_linear.1} parent=0 // pred_fallthru
    _

</llo_original>
